<compile_context>
chip_gen: v7x
topology: tpu7x:2x2x1
jax: 0.10.0
libtpu: 0.0.40
codegen_flags: <defaults>
</compile_context>

<pallas_src>
import functools

import jax
import jax.numpy as jnp
import numpy as np
from jax import lax
from jax.experimental import pallas as pl
from jax.experimental.pallas import tpu as pltpu

_VMEM_LIMIT = 32 * 1024 * 1024   # safe on v5e/v6e/v7x; raise toward 64-96 MiB on v5e/v6e
_TILE_P_DEFAULT = 512            # vertex-tile size target (multiple of 8);
                                 # 1024-2048 recommended on v5e/v6e (128 MiB VMEM)


# ------------------------------------------------------------------ activations
def _apply_activation(acc, activation):
    if activation == "elu":
        return jnp.where(acc > 0.0, acc, jnp.expm1(jnp.minimum(acc, 0.0)))
    if activation == "relu":
        return jnp.maximum(acc, 0.0)
    if activation == "leaky_relu":
        # matches the source module: nn.LeakyReLU(0.02)
        return jnp.where(acc > 0.0, acc, 0.02 * acc)
    if activation == "sigmoid":
        return jax.nn.sigmoid(acc)
    if activation == "tanh":
        return jnp.tanh(acc)
    if activation == "identity":
        return acc
    raise NotImplementedError(activation)


# ------------------------------------------------------------------ kernel 1: x_up = U @ x
# x is a (P_old, B*F) lane slab -> U streamed once, MXU N = B*F.
def _upsample_kernel(u_ref, x_ref, o_ref, *, compute_dtype):
    o_ref[...] = jnp.dot(u_ref[...], x_ref[...].astype(compute_dtype),
                         preferred_element_type=jnp.float32)


def upsample_pallas(U_c, x_lane, tile_p, compute_dtype):
    """U_c: (P_new, P_old) compute_dtype; x_lane: (P_old, B*F) f32 -> (P_new, B*F) f32."""
    P_old, BF = x_lane.shape
    P_new = U_c.shape[0]
    nt = pl.cdiv(P_new, tile_p)
    kernel = functools.partial(_upsample_kernel, compute_dtype=compute_dtype)
    return pl.pallas_call(
        kernel,
        out_shape=jax.ShapeDtypeStruct((P_new, BF), jnp.float32),
        grid=(nt,),
        in_specs=[
            pl.BlockSpec((tile_p, P_old), lambda t: (t, 0)),     # U tile: fetched once
            pl.BlockSpec((P_old, BF), lambda t: (0, 0)),         # x slab: resident
        ],
        out_specs=pl.BlockSpec((tile_p, BF), lambda t: (t, 0)),
        compiler_params=pltpu.CompilerParams(
            dimension_semantics=("parallel",),
            vmem_limit_bytes=_VMEM_LIMIT,
        ),
    )(U_c, x_lane)


# ------------------------------------------------------------------ kernel 2: fused SpiralConv
# Spiral gather (SMEM-prefetched adjacency, unrolled loop, lane-dense rows) +
# S accumulating matmuls + bias + activation + dummy-vertex zeroing
# (+ fused "vertices_disp + template" on the last conv).
def _spiral_conv_kernel(adj_ref, xu_ref, w_ref, b_ref, *rest,
                        spiral_size, f_in, f_out, batch, tile_p, p_new,
                        activation, fuse_template, compute_dtype):
    if fuse_template:
        t_ref, o_ref, v_ref, g_scr = rest
    else:
        o_ref, g_scr = rest
        t_ref = v_ref = None

    t_idx = pl.program_id(0)
    base0 = t_idx * (tile_p * spiral_size)

    # ---- gather phase: tile_p*S dynamic (1, B*F_in) row loads, direct contiguous stores
    #      (no per-row concatenate / lane shifting); unroll=8 to fill vld / scalar slots.
    def gather_row(p, carry):
        row_base = base0 + p * spiral_size
        for s in range(spiral_size):                     # S static: unrolled
            idx = adj_ref[row_base + s]                  # pre-clamped in __init__
            g_scr[s, pl.ds(p, 1), :] = xu_ref[pl.ds(idx, 1), :]
        return carry

    lax.fori_loop(0, tile_p, gather_row, 0, unroll=8)

    # ---- linear phase: sum_s g[s] @ W[s]; batch folded into M via static lane slices.
    bias = b_ref[...]                                    # (1, f_out) f32
    accs = [jnp.zeros((tile_p, f_out), jnp.float32) for _ in range(batch)]
    for s in range(spiral_size):
        g_s = g_scr[s].astype(compute_dtype)             # (tile_p, batch*f_in)
        w_s = w_ref[s]                                    # (f_in, f_out)
        for b in range(batch):
            g_b = g_s[:, b * f_in:(b + 1) * f_in]         # static lane slice
            accs[b] = accs[b] + jnp.dot(g_b, w_s, preferred_element_type=jnp.float32)

    outs = [_apply_activation(a + bias, activation) for a in accs]
    out = outs[0] if batch == 1 else jnp.concatenate(outs, axis=1)   # (tile_p, batch*f_out)

    o_ref[...] = out
    if fuse_template:
        v_ref[...] = out + t_ref[...]

    # zero_padding: only the single dummy (last) vertex row needs zeroing.
    dummy_tile = (p_new - 1) // tile_p
    dummy_local = (p_new - 1) % tile_p

    @pl.when(t_idx == dummy_tile)
    def _():
        zero = jnp.zeros((1, batch * f_out), jnp.float32)
        o_ref[pl.ds(dummy_local, 1), :] = zero
        if fuse_template:
            # template's dummy row is zero-padded, so verts dummy row is zero as well.
            v_ref[pl.ds(dummy_local, 1), :] = zero


def spiral_conv_pallas(x_lane, adj_flat, w3_c, b2, *, spiral_size, f_in, f_out,
                       batch, p_new, tile_p, activation, compute_dtype, template=None):
    """x_lane: (P_up, B*F_in) f32 gather source; adj_flat: (nt*tile_p*S,) int32 (clamped,
    padded); w3_c: (S, F_in, F_out) compute_dtype; b2: (1, F_out) f32;
    template (optional): (P_new, B*F_out) f32 lane slab with a zero dummy row."""
    p_up, _ = x_lane.shape
    nt = pl.cdiv(p_new, tile_p)
    fuse_template = template is not None

    kernel = functools.partial(
        _spiral_conv_kernel, spiral_size=spiral_size, f_in=f_in, f_out=f_out,
        batch=batch, tile_p=tile_p, p_new=p_new, activation=activation,
        fuse_template=fuse_template, compute_dtype=compute_dtype)

    in_specs = [
        pl.BlockSpec((p_up, batch * f_in), lambda t, adj: (0, 0)),          # resident slab
        pl.BlockSpec((spiral_size, f_in, f_out), lambda t, adj: (0, 0, 0)),  # weights
        pl.BlockSpec((1, f_out), lambda t, adj: (0, 0)),                     # bias
    ]
    inputs = [x_lane, w3_c, b2]
    out_shape = [jax.ShapeDtypeStruct((p_new, batch * f_out), jnp.float32)]
    out_specs = [pl.BlockSpec((tile_p, batch * f_out), lambda t, adj: (t, 0))]
    if fuse_template:
        in_specs.append(pl.BlockSpec((tile_p, batch * f_out), lambda t, adj: (t, 0)))
        inputs.append(template)
        out_shape.append(jax.ShapeDtypeStruct((p_new, batch * f_out), jnp.float32))
        out_specs.append(pl.BlockSpec((tile_p, batch * f_out), lambda t, adj: (t, 0)))

    grid_spec = pltpu.PrefetchScalarGridSpec(
        num_scalar_prefetch=1,
        grid=(nt,),
        in_specs=in_specs,
        out_specs=out_specs,
        scratch_shapes=[pltpu.VMEM((spiral_size, tile_p, batch * f_in), jnp.float32)],
    )
    out = pl.pallas_call(
        kernel,
        grid_spec=grid_spec,
        out_shape=out_shape,
        compiler_params=pltpu.CompilerParams(
            dimension_semantics=("parallel",),
            vmem_limit_bytes=_VMEM_LIMIT,
        ),
    )(adj_flat, *inputs)
    if fuse_template:
        return out[0], out[1]
    return out[0]


# ------------------------------------------------------------------ parameter init (torch-like)
def _init_linear(key, out_dim, in_dim):
    k1, k2 = jax.random.split(key)
    bound = 1.0 / np.sqrt(in_dim)
    w = jax.random.uniform(k1, (out_dim, in_dim), jnp.float32, -bound, bound)
    b = jax.random.uniform(k2, (out_dim,), jnp.float32, -bound, bound)
    return w, b


class SpiralDecoderPallas:
    def __init__(self, filters_dec, nbr_landmarks, sizes, spiral_sizes, spirals, U,
                 key, activation="elu", compute_dtype=jnp.bfloat16,
                 tile_p_max=_TILE_P_DEFAULT):
        assert tile_p_max % 8 == 0
        self.filters_dec = filters_dec
        self.sizes = sizes
        self.spiral_sizes = spiral_sizes
        self.spirals = [jnp.asarray(s, jnp.int32) for s in spirals]
        self.U = [jnp.asarray(u, jnp.float32) for u in U]
        self.activation = activation
        self.compute_dtype = compute_dtype
        self.tile_p_max = int(tile_p_max)

        F0 = filters_dec[0][0]
        key, kfc = jax.random.split(key)
        self.fc_w, self.fc_b = _init_linear(kfc, (sizes[-1] + 1) * F0, nbr_landmarks * 3)
        self.fc_wt = jnp.transpose(self.fc_w)            # fc stays in XLA (tiny K)

        # dconv construction: same branching as the PyTorch module
        # entries: (w_f32, b_f32, activation, spiral_size, level, has_upsample)
        self.dconv = []
        input_size = F0
        n_levels = len(spiral_sizes) - 1
        for i in range(n_levels):
            ss = spiral_sizes[-2 - i]
            if i != n_levels - 1:
                key, k = jax.random.split(key)
                w, b = _init_linear(k, filters_dec[0][i + 1], input_size * ss)
                self.dconv.append((w, b, activation, ss, i, True))
                input_size = filters_dec[0][i + 1]
                if filters_dec[1][i + 1]:
                    key, k = jax.random.split(key)
                    w, b = _init_linear(k, filters_dec[1][i + 1], input_size * ss)
                    self.dconv.append((w, b, activation, ss, i, False))
                    input_size = filters_dec[1][i + 1]
            elif filters_dec[1][i + 1]:
                key, k = jax.random.split(key)
                w, b = _init_linear(k, filters_dec[0][i + 1], input_size * ss)
                self.dconv.append((w, b, activation, ss, i, True))
                input_size = filters_dec[0][i + 1]
                key, k = jax.random.split(key)
                w, b = _init_linear(k, filters_dec[1][i + 1], input_size * ss)
                self.dconv.append((w, b, "identity", ss, i, False))
                input_size = filters_dec[1][i + 1]
            else:
                key, k = jax.random.split(key)
                w, b = _init_linear(k, filters_dec[0][i + 1], input_size * ss)
                self.dconv.append((w, b, "identity", ss, i, True))
                input_size = filters_dec[0][i + 1]

        # hoisted per-layer kernel operands (no per-call glue)
        self.layer_plans = []
        for (w, b, act, ss, level, has_up) in self.dconv:
            adj = self.spirals[-2 - level]                       # (P_new, S)
            p_new, S = adj.shape
            f_out, sf = w.shape
            f_in = sf // S
            tile_p = p_new if p_new <= self.tile_p_max else self.tile_p_max
            nt = pl.cdiv(p_new, tile_p)
            adj_c = jnp.clip(adj, 0, p_new - 1)                  # clamp hoisted out of kernel
            pad_rows = nt * tile_p - p_new
            if pad_rows:
                adj_c = jnp.concatenate(
                    [adj_c, jnp.zeros((pad_rows, S), jnp.int32)], axis=0)
            self.layer_plans.append(dict(
                level=level,
                # (S, F_in, F_out): per-spiral-step weight blocks for accumulating matmuls
                w3_c=jnp.transpose(w).reshape(S, f_in, f_out).astype(compute_dtype),
                b2=b.reshape(1, -1),
                adj_flat=adj_c.reshape(-1),                      # 1-D int32 in SMEM
                U_c=(self.U[-1 - level].astype(compute_dtype) if has_up else None),
                spiral_size=S, f_in=f_in, f_out=f_out,
                p_new=p_new, tile_p=tile_p, activation=act,
            ))

    # -------------------------------------------------------------- lane-slab helpers
    @staticmethod
    def _from_lane(x_lane, batch):
        P, BF = x_lane.shape
        F = BF // batch
        return x_lane.reshape(P, batch, F).transpose(1, 0, 2)     # (B, P, F)

    # -------------------------------------------------------------- forward
    def _decode(self, z, template_lane):
        batch = z.shape[0]
        F0 = self.filters_dec[0][0]
        P0 = self.sizes[-1] + 1
        # fc_latent_dec: left to XLA (tiny); output laid out as a (P0, B*F0) lane slab.
        x = z @ self.fc_wt + self.fc_b                           # (B, P0*F0)
        x = x.reshape(batch, P0, F0).transpose(1, 0, 2).reshape(P0, batch * F0)

        X = []
        verts = None
        last = len(self.layer_plans) - 1
        for li, plan in enumerate(self.layer_plans):
            if plan["U_c"] is not None:
                x = upsample_pallas(plan["U_c"], x, plan["tile_p"], self.compute_dtype)
            tmpl = template_lane if (li == last and template_lane is not None) else None
            out = spiral_conv_pallas(
                x, plan["adj_flat"], plan["w3_c"], plan["b2"],
                spiral_size=plan["spiral_size"], f_in=plan["f_in"], f_out=plan["f_out"],
                batch=batch, p_new=plan["p_new"], tile_p=plan["tile_p"],
                activation=plan["activation"], compute_dtype=self.compute_dtype,
                template=tmpl)
            if tmpl is not None:
                x, verts = out
            else:
                x = out
            is_level_end = (li == last) or (self.layer_plans[li + 1]["level"] != plan["level"])
            if is_level_end:
                X.append(x)
        return x, verts, X

    def decode(self, z):
        batch = z.shape[0]
        x_lane, _, X = self._decode(z, None)
        return self._from_lane(x_lane, batch), [self._from_lane(xi, batch) for xi in X]

    def __call__(self, lands_disp, template):
        batch, Pm1, C = template.shape
        tpad = jnp.concatenate(
            [template.astype(jnp.float32),
             jnp.zeros((batch, 1, C), jnp.float32)], axis=1)                 # (B, P, 3)
        t_lane = jnp.transpose(tpad, (1, 0, 2)).reshape(Pm1 + 1, batch * C)  # (P, B*3)
        x_lane, v_lane, _ = self._decode(lands_disp, t_lane)
        x = self._from_lane(x_lane, batch)[:, :-1, :]
        v = self._from_lane(v_lane, batch)[:, :-1, :]
        return x, v


# ------------------------------------------------------------------ pure-JAX reference
def _ref_spiral_conv(x, adj, w, b, act):
    B, P, F = x.shape
    S = adj.shape[1]
    spirals = x[:, adj.reshape(-1), :].reshape(B, P, S * F)
    out = spirals @ w.T + b
    if act == "elu":
        out = jnp.where(out > 0.0, out, jnp.expm1(out))
    mask = jnp.ones((1, P, 1), jnp.float32).at[0, -1, 0].set(0.0)
    return out * mask


def _ref_forward(dec, lands_disp, template):
    B = lands_disp.shape[0]
    F0 = dec.filters_dec[0][0]
    x = lands_disp @ dec.fc_w.T + dec.fc_b
    x = x.reshape(B, dec.sizes[-1] + 1, F0)
    for (w, b, act, ss, level, has_up) in dec.dconv:
        if has_up:
            x = jnp.einsum("nm,bmf->bnf", dec.U[-1 - level], x)
        x = _ref_spiral_conv(x, dec.spirals[-2 - level], w, b, act)
    vd = x[:, :-1, :]
    return vd, vd + template


# ------------------------------------------------------------------ test
if __name__ == "__main__":
    key = jax.random.PRNGKey(0)

    B = 2
    nbr_landmarks = 4
    sizes = [16, 8, 4]                        # vertices per level (finest -> coarsest)
    spiral_sizes = [8, 8, 8]                  # spiral length per level
    filters_dec = [[16, 16, 3], [0, 16, 0]]   # level 0: two convs (elu); level 1: identity

    key, k0, k1, k2 = jax.random.split(key, 4)
    spirals = [
        jax.random.randint(k0, (sizes[0] + 1, spiral_sizes[0]), 0, sizes[0] + 1, jnp.int32),
        jax.random.randint(k1, (sizes[1] + 1, spiral_sizes[1]), 0, sizes[1] + 1, jnp.int32),
        jax.random.randint(k2, (sizes[2] + 1, spiral_sizes[2]), 0, sizes[2] + 1, jnp.int32),
    ]
    key, ku0, ku1 = jax.random.split(key, 3)
    U = [
        jax.random.uniform(ku0, (sizes[0] + 1, sizes[1] + 1), jnp.float32),
        jax.random.uniform(ku1, (sizes[1] + 1, sizes[2] + 1), jnp.float32),
    ]

    key, kp = jax.random.split(key)
    # tile_p_max=8 exercises the multi-tile / padded-adjacency path (bf16 production path);
    # tile_p_max=16 exercises the full-block path (f32 tight-tolerance path).
    dec_bf16 = SpiralDecoderPallas(filters_dec, nbr_landmarks, sizes, spiral_sizes,
                                   spirals, U, kp, activation="elu",
                                   compute_dtype=jnp.bfloat16, tile_p_max=8)
    dec_f32 = SpiralDecoderPallas(filters_dec, nbr_landmarks, sizes, spiral_sizes,
                                  spirals, U, kp, activation="elu",
                                  compute_dtype=jnp.float32, tile_p_max=16)

    key, kz, kt = jax.random.split(key, 3)
    lands_disp = jax.random.normal(kz, (B, nbr_landmarks * 3), jnp.float32)
    template = jax.random.normal(kt, (B, sizes[0], 3), jnp.float32)

    vdisp, verts = dec_bf16(lands_disp, template)      # production (bf16 MXU) path
    vdisp = jax.block_until_ready(vdisp)
    verts = jax.block_until_ready(verts)

    vdisp32, verts32 = dec_f32(lands_disp, template)   # f32 path for a tighter check
    verts32 = jax.block_until_ready(verts32)

    vdisp_ref, verts_ref = _ref_forward(dec_bf16, lands_disp, template)

    assert np.allclose(np.asarray(vdisp32), np.asarray(vdisp_ref), rtol=2e-2, atol=2e-2)
    assert np.allclose(np.asarray(verts32), np.asarray(verts_ref), rtol=2e-2, atol=2e-2)
    assert np.allclose(np.asarray(vdisp), np.asarray(vdisp_ref), rtol=5e-2, atol=5e-2)
    assert np.allclose(np.asarray(verts), np.asarray(verts_ref), rtol=5e-2, atol=5e-2)

    print("KERNEL_OK")
</pallas_src>

<mosaic_0001>
module attributes {stable_mosaic.version = 11 : i64} {
  func.func @_upsample_kernel(%arg0: i32, %arg1: memref<8x5xbf16, #tpu.memory_space<vmem>>, %arg2: memref<5x32xf32, #tpu.memory_space<vmem>>, %arg3: memref<8x32xf32, #tpu.memory_space<vmem>>) attributes {dimension_semantics = [#tpu.dimension_semantics<parallel>], iteration_bounds = array<i64: 2>, scalar_prefetch = 0 : i64, scratch_operands = 0 : i64, tpu.core_type = #tpu.core_type<tc>, window_params = [{transform_indices = @transform_0, window_bounds = array<i64: 8, 5>}, {pipeline_mode = #tpu.pipeline_mode<synchronous>, transform_indices = @transform_1, window_bounds = array<i64: 5, 32>}, {transform_indices = @transform_2, window_bounds = array<i64: 8, 32>}]} {
    %c0 = arith.constant 0 : index
    %c0_0 = arith.constant 0 : index
    %0 = vector.load %arg1[%c0, %c0_0] : memref<8x5xbf16, #tpu.memory_space<vmem>>, vector<8x5xbf16>
    %c0_1 = arith.constant 0 : index
    %c0_2 = arith.constant 0 : index
    %1 = vector.load %arg2[%c0_1, %c0_2] : memref<5x32xf32, #tpu.memory_space<vmem>>, vector<5x32xf32>
    %2 = arith.truncf %1 : vector<5x32xf32> to vector<5x32xbf16>
    %cst = arith.constant dense<0.000000e+00> : vector<8x32xf32>
    %3 = tpu.matmul %0, %2, %cst {dimension_numbers = #tpu.dot_dimension_numbers<[1], [0], [0], [1], [0, 0, 1, 1], [], []>} : vector<8x5xbf16>, vector<5x32xbf16>, vector<8x32xf32> -> vector<8x32xf32>
    %c0_3 = arith.constant 0 : index
    %c0_4 = arith.constant 0 : index
    %4 = vector.load %arg3[%c0_3, %c0_4] : memref<8x32xf32, #tpu.memory_space<vmem>>, vector<8x32xf32>
    tpu.vector_store %arg3[%c0_3, %c0_4], %3 {strides = array<i32>} : memref<8x32xf32, #tpu.memory_space<vmem>>, vector<8x32xf32>,
    return
  }
  func.func @transform_0(%arg0: i32) -> (i32, i32) {
    %c0_i32 = arith.constant 0 : i32
    %c0_i32_0 = arith.constant 0 : i32
    return %arg0, %c0_i32 : i32, i32
  }
  func.func @transform_1(%arg0: i32) -> (i32, i32) {
    %c0_i32 = arith.constant 0 : i32
    %c0_i32_0 = arith.constant 0 : i32
    %c0_i32_1 = arith.constant 0 : i32
    return %c0_i32, %c0_i32_0 : i32, i32
  }
  func.func @transform_2(%arg0: i32) -> (i32, i32) {
    %c0_i32 = arith.constant 0 : i32
    %c0_i32_0 = arith.constant 0 : i32
    return %arg0, %c0_i32 : i32, i32
  }
}

</mosaic_0001>

<llo_original>
// kernel: tpu_custom_call.1
$region0: #{tpu_custom_call.1}
  #allocation0 [shape = 'u32[]', space=smem, size = 0x4, offset = 0x4, fixed_abs, tag = 'smem constant byte address 0x4 - core index']
  #allocation1 [shape = 'u32[144,128]{1,0:T(1,128)}', space=vmem, size = 0x12000, scoped, tag = 'internal scratch']
  %s0 = inlined_call_operand.vmem [shape: bf16[9,5], index: 0, kind: input, shape index: {}]
  %s1 = inlined_call_operand.vmem [shape: f32[5,32], index: 1, kind: input, shape index: {}]
  %s2 = inlined_call_operand.hbm [shape: f32[9,32], index: 2, kind: output, shape index: {}]
  %s3 = sld [smem:[#allocation0]]
  $region41: #{tpu_custom_call.1} parent=0
    _
  %s5 = ssub.s32 1, %s3
  %s6 = scalar_select 0, %s5, %s3
  $region1: #{tpu_custom_call.1} parent=0
    #allocation2 [shape = 'u8[8192]{0}', space=vmem, size = 0x2000, scoped, tag = 'output window, operand 0']
    #allocation3 [shape = 's32[2]{0}', space=sflag, size = 0x8, scoped, tag = 'scoped memory for tpu_custom_call.1']
    %7 = vsyncpa [#allocation3], 0
    %s8 = scalar_lea.sflag [#allocation3], 1
    %9 = vsyncpa %s8, 0
    loop: start=0, step=1, limit=4
    $region2: #{tpu_custom_call.1} parent=1 // loop_pre_header
      _
    $region3: #{tpu_custom_call.1} parent=1 // loop_header
      %s11 = sphi 0, %s15
      %p12 = scmp.ge.s32.totalorder %s11, 4
      %s21 = sphi 0, %s23
      %s24 = sphi 0, %s21
      %s25 = sphi 0, %s24
      %s41 = sphi 0, %s25
      %s45 = sphi 0, %s45
      %s47 = sphi 0, %s45
      %s48 = sphi 0, %s47
      %s62 = sphi 0, %s48
      %s68 = sphi 0, %s70
      %s71 = sphi 0, %s68
      %s72 = sphi 0, %s71
      %s88 = sphi 0, %s72
    $region4: #{tpu_custom_call.1} parent=1 // loop_header_branch
      %14 = sbr.rel (%p12) target = $region8
    $region5: #{tpu_custom_call.1} parent=1 // loop_body
      %s16 = ssub.s32 %s11, 1
      %s17 = ssub.s32 %s11, 2
      %s18 = sadd.s32 %s11, 1
      %s19 = ssub.s32 %s11, %s18
      %p20 = scmp.eq.s32.totalorder %s19, 0
      %s22 = sadd.s32 %s21, 1
      %s23 = scalar_select %p20, %s21, %s22
      %p26 = pneg %p20
      %p27 = scmp.eq.s32.totalorder %s11, 1
      %p28 = por %p26, %p27
      %p29 = scmp.ne.s32.totalorder %s21, %s24
      %p30 = scmp.eq.s32.totalorder %s11, 0
      %p31 = por %p29, %p30
      %p32 = scmp.ne.s32.totalorder %s21, %s24
      %p33 = scmp.eq.s32.totalorder %s16, 1
      %p34 = por %p32, %p33
      %p35 = scmp.ne.s32.totalorder %s24, %s25
      %p36 = scmp.eq.s32.totalorder %s16, 0
      %p37 = por %p35, %p36
      %p38 = scmp.ne.s32.totalorder %s24, %s25
      %p39 = scmp.eq.s32.totalorder %s17, 1
      %p40 = por %p38, %p39
      %p42 = scmp.ne.s32.totalorder %s25, %s41
      %p43 = scmp.eq.s32.totalorder %s17, 0
      %p44 = por %p42, %p43
      %s46 = sadd.s32 %s45, 1
      %p49 = scmp.eq.s32.totalorder %s11, 1
      %p50 = scmp.ne.s32.totalorder %s45, %s47
      %p51 = scmp.eq.s32.totalorder %s11, 0
      %p52 = por %p50, %p51
      %p53 = scmp.ne.s32.totalorder %s45, %s47
      %p54 = scmp.eq.s32.totalorder %s16, 1
      %p55 = por %p53, %p54
      %p56 = scmp.ne.s32.totalorder %s47, %s48
      %p57 = scmp.eq.s32.totalorder %s16, 0
      %p58 = por %p56, %p57
      %p59 = scmp.ne.s32.totalorder %s47, %s48
      %p60 = scmp.eq.s32.totalorder %s17, 1
      %p61 = por %p59, %p60
      %p63 = scmp.ne.s32.totalorder %s48, %s62
      %p64 = scmp.eq.s32.totalorder %s17, 0
      %p65 = por %p63, %p64
      %s66 = ssub.s32 %s11, %s18
      %p67 = scmp.eq.s32.totalorder %s66, 0
      %s69 = sadd.s32 %s68, 1
      %s70 = scalar_select %p67, %s68, %s69
      %p73 = pneg %p67
      %p74 = scmp.eq.s32.totalorder %s11, 1
      %p75 = por %p73, %p74
      %p76 = scmp.ne.s32.totalorder %s68, %s71
      %p77 = scmp.eq.s32.totalorder %s11, 0
      %p78 = por %p76, %p77
      %p79 = scmp.ne.s32.totalorder %s68, %s71
      %p80 = scmp.eq.s32.totalorder %s16, 1
      %p81 = por %p79, %p80
      %p82 = scmp.ne.s32.totalorder %s71, %s72
      %p83 = scmp.eq.s32.totalorder %s16, 0
      %p84 = por %p82, %p83
      %p85 = scmp.ne.s32.totalorder %s71, %s72
      %p86 = scmp.eq.s32.totalorder %s17, 1
      %p87 = por %p85, %p86
      %p89 = scmp.ne.s32.totalorder %s72, %s88
      %p90 = scmp.eq.s32.totalorder %s17, 0
      %p91 = por %p89, %p90
      %p92 = scmp.le.s32.totalorder 1, %s11
      %p93 = scmp.lt.s32.totalorder %s11, 3
      %p94 = pnand %p92, %p93
      %p95 = pneg %p94
      // Predicated region
      $region9: #{tpu_custom_call.1} parent=5 // pred_check
        _
      $region10: #{tpu_custom_call.1} parent=5 // pred_check_branch
        %97 = sbr.rel (%p94) target = $region12
      $region11: #{tpu_custom_call.1} parent=5 // pred_region
        %s98 = ssub.s32 %s11, 1
        // Predicated region
        $region13: #{tpu_custom_call.1} parent=11 // pred_check
          %p99 = pneg %p58
        $region14: #{tpu_custom_call.1} parent=11 // pred_check_branch
          %101 = sbr.rel (%p99) target = $region16
        $region15: #{tpu_custom_call.1} parent=11 // pred_region
          _
        $region16: #{tpu_custom_call.1} parent=11 // pred_fallthru
          _
      $region12: #{tpu_custom_call.1} parent=5 // pred_fallthru
        _
      %p102 = scmp.lt.s32.totalorder %s11, 2
      // Predicated region
      $region17: #{tpu_custom_call.1} parent=5 // pred_check
        %p103 = pneg %p102
      $region18: #{tpu_custom_call.1} parent=5 // pred_check_branch
        %105 = sbr.rel (%p103) target = $region20
      $region19: #{tpu_custom_call.1} parent=5 // pred_region
        // Predicated region
        $region21: #{tpu_custom_call.1} parent=19 // pred_check
          %p106 = pneg %p31
        $region22: #{tpu_custom_call.1} parent=19 // pred_check_branch
          %108 = sbr.rel (%p106) target = $region24
        $region23: #{tpu_custom_call.1} parent=19 // pred_region
          %p109 = scmp.lt.s32.totalorder %s11, 1
          %s110 = scalar_select %p109, %s11, 1
          %s111 = smul.addr %s110, 4
          %s112 = scalar_lea.vmem %s0, %s111
        $region24: #{tpu_custom_call.1} parent=19 // pred_fallthru
          _
      $region20: #{tpu_custom_call.1} parent=5 // pred_fallthru
        _
      %p113 = scmp.le.s32.totalorder 1, %s11
      %p114 = scmp.lt.s32.totalorder %s11, 3
      %p115 = pnand %p113, %p114
      %p116 = pneg %p115
      // Predicated region
      $region25: #{tpu_custom_call.1} parent=5 // pred_check
        _
      $region26: #{tpu_custom_call.1} parent=5 // pred_check_branch
        %118 = sbr.rel (%p115) target = $region28
      $region27: #{tpu_custom_call.1} parent=5 // pred_region
        %s119 = ssub.s32 %s11, 1
        %p120 = scmp.lt.s32.totalorder %s16, 1
        %s121 = scalar_select %p120, %s16, 1
        %s122 = smul.addr %s121, 4
        %s123 = scalar_lea.vmem %s0, %s122
        %p124 = pneg %p37
        %p125 = pneg %p34
        %p126 = pneg %p58
        %p127 = pneg %p55
        %p128 = pneg %p84
        %p129 = pneg %p81
        %s130 = sand.u32 %s71, 1
        %s131 = scalar_lea.sflag [#allocation3], %s130
        %s132 = sand.u32 %s71, 1
        %s133 = smul.addr %s132, 8
        %s134 = scalar_lea.vmem [#allocation2], %s133
        %p135 = scmp.lt.s32.totalorder %s16, 1
        %s136 = scalar_select %p135, %s16, 1
        %s137 = smul.addr %s136, 4
        %s138 = scalar_lea.vmem %s0, %s137
        %v140 = vld [vmem:[%s138] sm:$0xf]
        %v141 = vld [vmem:[%s1] sm:$0x1f]
        %v142 = vpack.c.bf16 %v141, %v141
        %vm143 = vcmask 39936
        %v145 = vsel %vm143, %v140, 0
        %vm147 = vcmask 1041408
        %vm148 = vcmask 1042432
        %v149 = vsel %vm147, 4294967295, 65535
        %v150 = vsel %vm148, %v149, 0
        %v152 = vand.u32 %v142, %v150
        %154 = vmatprep.subr.bf16.mxu0 0
        %155 = vmatpush1.bf16.msra.mxu0 %v152
        %156 = vmatprep.subr.bf16.mxu0 0
        %157 = vmatpush1.bf16.msra.mxu0 0
        %158 = vmatprep.subr.bf16.mxu0 0
        %159 = vmatpush1.bf16.msra.mxu0 0
        %160 = vmatprep.subr.bf16.mxu0 0
        %161 = vmatpush1.bf16.msra.mxu0 0
        %162 = vmatprep.subr.bf16.mxu0 0
        %163 = vmatpush1.bf16.msra.mxu0 0
        %164 = vmatprep.subr.bf16.mxu0 0
        %165 = vmatpush1.bf16.msra.mxu0 0
        %166 = vmatprep.subr.bf16.mxu0 0
        %167 = vmatpush1.bf16.msra.mxu0 0
        %168 = vmatprep.subr.bf16.mxu0 0
        %169 = vmatpush1.bf16.msra.mxu0 0
        %170 = vmatprep.subr.bf16.mxu0 0
        %171 = vmatpush1.bf16.msra.mxu0 0
        %172 = vmatprep.subr.bf16.mxu0 0
        %173 = vmatpush1.bf16.msra.mxu0 0
        %174 = vmatprep.subr.bf16.mxu0 0
        %175 = vmatpush1.bf16.msra.mxu0 0
        %176 = vmatprep.subr.bf16.mxu0 0
        %177 = vmatpush1.bf16.msra.mxu0 0
        %178 = vmatprep.subr.bf16.mxu0 0
        %179 = vmatpush1.bf16.msra.mxu0 0
        %180 = vmatprep.subr.bf16.mxu0 0
        %181 = vmatpush1.bf16.msra.mxu0 0
        %182 = vmatprep.subr.bf16.mxu0 0
        %183 = vmatpush1.bf16.msra.mxu0 0
        %184 = vmatprep.subr.bf16.mxu0 0
        %185 = vmatpush1.bf16.msra.mxu0 0
        %186 = vmatprep.mubr.bf16.mxu0 0
        %187 = vmatmul.mubr.bf16.gmra.mrb[0].mxu0 %v145
        %v188 = vpop.f32.mrb[0].mxu0
        %v189 = vadd.f32 0.0, %v188
        %v190 = vpop.f32.mrb[0].mxu0
        %v191 = vpop.f32.mrb[0].mxu0
        %v192 = vpop.f32.mrb[0].mxu0
        %193 = vdwg.mxu0
        %vm194 = vcmask 261120
        %195 = vst.msk [vmem:[%s134] sm:$0xff] %vm194, %v189
        %s196 = sand.u32 %s71, 1
        %s197 = scalar_lea.sflag [#allocation3], %s196
        %s198 = sand.u32 %s71, 1
        %s199 = smul.addr %s198, 8
        %s200 = scalar_lea.vmem [#allocation2], %s199
        // Predicated region
        $region29: #{tpu_custom_call.1} parent=27 // pred_check
          %p201 = pneg %p81
        $region30: #{tpu_custom_call.1} parent=27 // pred_check_branch
          %203 = sbr.rel (%p201) target = $region32
        $region31: #{tpu_custom_call.1} parent=27 // pred_region
          %s205 = ssub.s32 128, 128
          %206 = vsyncadd %s197, %s205
          %s207 = smul.addr %s16, 128
          %s208 = scalar_lea.hbm %s2, %s207
          %s210 = sshll.u32 %s200, 4
          %s211 = int_to_ptr.vmem [resolvable:$true] %s210
          %213 = dma.vmem_to_hbm [thread:$0]  %s211, 128, %s208, %s197
        $region32: #{tpu_custom_call.1} parent=27 // pred_fallthru
          _
      $region28: #{tpu_custom_call.1} parent=5 // pred_fallthru
        _
      %p214 = scmp.le.s32.totalorder 2, %s11
      // Predicated region
      $region33: #{tpu_custom_call.1} parent=5 // pred_check
        %p215 = pneg %p214
      $region34: #{tpu_custom_call.1} parent=5 // pred_check_branch
        %217 = sbr.rel (%p215) target = $region36
      $region35: #{tpu_custom_call.1} parent=5 // pred_region
        %s218 = ssub.s32 %s11, 2
        // Predicated region
        $region37: #{tpu_custom_call.1} parent=35 // pred_check
          %p219 = pneg %p87
        $region38: #{tpu_custom_call.1} parent=35 // pred_check_branch
          %221 = sbr.rel (%p219) target = $region40
        $region39: #{tpu_custom_call.1} parent=35 // pred_region
          %s222 = sand.u32 %s72, 1
          %s223 = scalar_lea.sflag [#allocation3], %s222
          %s224 = sand.u32 %s72, 1
          %s225 = smul.addr %s224, 8
          %s226 = scalar_lea.vmem [#allocation2], %s225
          %227 = dma.done %s223, 128
        $region40: #{tpu_custom_call.1} parent=35 // pred_fallthru
          _
      $region36: #{tpu_custom_call.1} parent=5 // pred_fallthru
        _
    $region6: #{tpu_custom_call.1} parent=1 // loop_footer
      %s15 = sadd.s32 1, %s11
    $region7: #{tpu_custom_call.1} parent=1 // loop_footer_branch
      %10 = sbr.rel target = $region3
    $region8: #{tpu_custom_call.1} parent=1 // loop_exit
      _
    %228 = vsyncpa [#allocation3], 1
    %s229 = scalar_lea.sflag [#allocation3], 1
    %230 = vsyncpa %s229, 1

</llo_original>
